<compile_context>
chip_gen: v7x
topology: tpu7x:2x2x1
jax: 0.10.0
libtpu: 0.0.40
codegen_flags: <defaults>
</compile_context>

<pallas_src>
import functools
import math

import jax
import jax.numpy as jnp
from jax.experimental import pallas as pl
from jax.experimental.pallas import tpu as pltpu


# ---------------------------------------------------------------------------
# VMEM budgeting: generation dependent (128 MiB physical on v5e/v6e, 64 MiB on
# v7x).  Request ~3/4 of physical (capped at 100 MiB) as the scoped limit and
# size tiles against ~80% of that so the 2-deep pipelines stay resident.
# ---------------------------------------------------------------------------
@functools.lru_cache(maxsize=None)
def _vmem_limit_bytes():
    cap = 128 * 1024 * 1024
    try:
        info = pltpu.get_tpu_info()
        cap = int(getattr(info, "vmem_capacity_bytes", cap) or cap)
    except Exception:
        pass
    return min((cap * 3) // 4, 100 * 1024 * 1024)


def _tile_budget():
    return int(0.8 * _vmem_limit_bytes())


def _compiler_params(dimension_semantics):
    return pltpu.CompilerParams(dimension_semantics=dimension_semantics,
                                vmem_limit_bytes=_vmem_limit_bytes())


def _resident_spec(block_shape, index_map):
    """Single-buffered BlockSpec for constant-index blocks (weights, biases, K/V).
    Default double-buffering would double their VMEM footprint with no overlap win."""
    try:
        return pl.BlockSpec(block_shape, index_map, pipeline_mode=pl.Buffered(1))
    except TypeError:  # jax without BlockSpec.pipeline_mode
        return pl.BlockSpec(block_shape, index_map)


_PREFERRED_TILES = (1024, 512, 256, 128, 64, 32, 16, 8)


def _pick_tile(dim, bytes_of, budget, preferred=_PREFERRED_TILES):
    """Largest MXU/sublane-friendly divisor of `dim` whose resident set fits budget."""
    divisors = [t for t in preferred if t <= dim and dim % t == 0]
    for t in divisors:
        if bytes_of(t) <= budget:
            return t
    return divisors[-1] if divisors else dim


# ---------------------------------------------------------------------------
# Kernel 1: Q/K/V projections.  One pallas_call, row grid, weights resident in
# VMEM across the grid (constant index_map, single-buffered).  A fused
# single-matmul variant is used for self-attention (Q is K is V).
# TODO(synk): for very large d_model the (d_model, H*d) weight block no longer
# fits a single VMEM block; add N/K tiling with an f32 accumulator + pl.when.
# ---------------------------------------------------------------------------
def _qkv_proj_kernel(xq_ref, xk_ref, xv_ref, wq_ref, wk_ref, wv_ref,
                     bq_ref, bk_ref, bv_ref, q_ref, k_ref, v_ref):
    q_ref[...] = (jnp.dot(xq_ref[...], wq_ref[...],
                          preferred_element_type=jnp.float32)
                  + bq_ref[...]).astype(q_ref.dtype)
    k_ref[...] = (jnp.dot(xk_ref[...], wk_ref[...],
                          preferred_element_type=jnp.float32)
                  + bk_ref[...]).astype(k_ref.dtype)
    v_ref[...] = (jnp.dot(xv_ref[...], wv_ref[...],
                          preferred_element_type=jnp.float32)
                  + bv_ref[...]).astype(v_ref.dtype)


def _qkv_fused_kernel(x_ref, w_ref, b_ref, q_ref, k_ref, v_ref, *, n_q, n_k):
    # Self-attention: one X DMA stream + one long MXU burst instead of three.
    y = (jnp.dot(x_ref[...], w_ref[...], preferred_element_type=jnp.float32)
         + b_ref[...])
    q_ref[...] = y[:, :n_q].astype(q_ref.dtype)
    k_ref[...] = y[:, n_q:n_q + n_k].astype(k_ref.dtype)
    v_ref[...] = y[:, n_q + n_k:].astype(v_ref.dtype)


def qkv_projection(xq, xk, xv, wq, bq, wk, bk, wv, bv, *, fused):
    M, d_model = xq.shape
    n_q, n_k, n_v = wq.shape[1], wk.shape[1], wv.shape[1]
    n_tot = n_q + n_k + n_v
    isz = xq.dtype.itemsize
    n_x = 1 if fused else 3

    def bytes_of(tm):
        return (2 * n_x * tm * d_model * isz        # double-buffered activations
                + d_model * n_tot * isz             # resident weights (Buffered(1))
                + 2 * tm * n_tot * isz              # double-buffered outputs
                + 2 * tm * n_tot * 4)               # f32 temporaries

    tm = _pick_tile(M, bytes_of, _tile_budget())
    row = lambda n: pl.BlockSpec((tm, n), lambda i: (i, 0))
    out_shape = (jax.ShapeDtypeStruct((M, n_q), xq.dtype),
                 jax.ShapeDtypeStruct((M, n_k), xq.dtype),
                 jax.ShapeDtypeStruct((M, n_v), xq.dtype))
    out_specs = (row(n_q), row(n_k), row(n_v))
    cp = _compiler_params(("parallel",))

    if fused:
        w = jnp.concatenate([wq, wk, wv], axis=1)
        b = jnp.concatenate([bq, bk, bv]).reshape(1, n_tot)
        return pl.pallas_call(
            functools.partial(_qkv_fused_kernel, n_q=n_q, n_k=n_k),
            out_shape=out_shape,
            grid=(M // tm,),
            in_specs=[row(d_model),
                      _resident_spec((d_model, n_tot), lambda i: (0, 0)),
                      _resident_spec((1, n_tot), lambda i: (0, 0))],
            out_specs=out_specs,
            compiler_params=cp,
        )(xq, w, b)

    return pl.pallas_call(
        _qkv_proj_kernel,
        out_shape=out_shape,
        grid=(M // tm,),
        in_specs=[row(d_model), row(d_model), row(d_model),
                  _resident_spec((d_model, n_q), lambda i: (0, 0)),
                  _resident_spec((d_model, n_k), lambda i: (0, 0)),
                  _resident_spec((d_model, n_v), lambda i: (0, 0)),
                  _resident_spec((1, n_q), lambda i: (0, 0)),
                  _resident_spec((1, n_k), lambda i: (0, 0)),
                  _resident_spec((1, n_v), lambda i: (0, 0))],
        out_specs=out_specs,
        compiler_params=cp,
    )(xq, xk, xv, wq, wk, wv,
      bq.reshape(1, n_q), bk.reshape(1, n_k), bv.reshape(1, n_v))


# ---------------------------------------------------------------------------
# Kernel 2: attention.  Grid = (batch, head-groups, q-tiles).  A group of `hg`
# heads is processed per step; the group's K/V stay resident (constant index
# along the inner q-tile axis, single-buffered).  Each head's probabilities and
# context are written straight to their output slices as they are produced (no
# Python-list concat -> no H live f32 partials / spill and no lane-shuffle
# epilogue).  The context lands directly in the lane-dense (B, S, H*d_v) layout
# the output projection consumes.  The attention-probability tensor is a
# mandatory module output (inherently O(S^2 * H) HBM writeback).
# TODO(synk): for very long sequences add a KV-tile grid axis with flash-style
# online-softmax accumulators instead of keeping the full (S, hg*d) K/V block.
# ---------------------------------------------------------------------------
def _mha_attn_kernel(q_ref, k_ref, v_ref, ctx_ref, attn_ref, *, hg, d_k, d_v, scale):
    # Fold 1/sqrt(d_k) into q (O(tq*hg*d_k)) in q's native dtype; K and V are fed
    # to the MXU in their native dtype (no full-K f32 cast pass).
    q = q_ref[0] * scale                                      # (tq, hg*d_k)
    for h in range(hg):                                       # static unroll over heads
        qh = q[:, h * d_k:(h + 1) * d_k]                      # (tq, d_k)
        kh = k_ref[0, :, h * d_k:(h + 1) * d_k]               # (S,  d_k)
        vh = v_ref[0, :, h * d_v:(h + 1) * d_v]               # (S,  d_v)
        # Contract both operands on their last dim (Q @ K^T), no explicit K.T value.
        # TODO(synk): verify in the Mosaic dump that no per-head XLU transpose of K
        # is materialized; if it is, emit per-head K^T from the projection kernel.
        s = jax.lax.dot_general(qh, kh, (((1,), (1,)), ((), ())),
                                preferred_element_type=jnp.float32)   # (tq, S)
        s = s - jnp.max(s, axis=-1, keepdims=True)
        e = jnp.exp(s)
        # Exact reciprocal over the (tq, 1) denominator: negligible cost and the
        # returned probability rows match the reference softmax (sum to 1).
        p = e * (1.0 / jnp.sum(e, axis=-1, keepdims=True))
        attn_ref[0, h] = p.astype(attn_ref.dtype)
        ctx_ref[0, :, h * d_v:(h + 1) * d_v] = jnp.dot(
            p.astype(vh.dtype), vh,
            preferred_element_type=jnp.float32).astype(ctx_ref.dtype)


def _pick_head_group(n_heads, d_k, d_v, S, isz, budget):
    """Heads per grid step: largest head group whose K/V block fits comfortably,
    subject to the packed-head lane (128) constraint on sub-blocks."""
    valid = [hg for hg in range(n_heads, 0, -1)
             if n_heads % hg == 0
             and (hg == n_heads or ((hg * d_k) % 128 == 0 and (hg * d_v) % 128 == 0))]
    for hg in valid:
        if S * hg * (d_k + d_v) * isz <= budget // 2:
            return hg
    return valid[-1]


def attention(q, k, v, n_heads, d_k, d_v, attn_dtype=None):
    B, S, _ = q.shape
    isz = q.dtype.itemsize
    # NOTE: passing attn_dtype=jnp.bfloat16 halves the dominant O(S^2*H) HBM
    # writeback; default keeps float parity with the reference module output.
    attn_dtype = attn_dtype or q.dtype
    attn_isz = jnp.dtype(attn_dtype).itemsize
    budget = _tile_budget()

    hg = _pick_head_group(n_heads, d_k, d_v, S, isz, budget)

    def bytes_of(tq):
        return (S * hg * (d_k + d_v) * isz          # resident K/V (Buffered(1))
                + 2 * tq * hg * d_k * isz           # q tile (double-buffered)
                + 2 * tq * hg * d_v * isz           # ctx tile
                + 2 * hg * tq * S * attn_isz        # attn tile (dominant)
                + 3 * tq * S * 4                    # f32 score/exp temporaries
                + tq * hg * max(d_k, d_v) * 4)

    tq = _pick_tile(S, bytes_of, budget)
    # v7x has 2 TensorCores: keep >= 2 parallel grid steps for decode-style shapes.
    if B * (n_heads // hg) * (S // tq) < 2 and S % 16 == 0:
        tq = S // 2

    kernel = functools.partial(_mha_attn_kernel, hg=hg, d_k=d_k, d_v=d_v,
                               scale=1.0 / math.sqrt(d_k))
    return pl.pallas_call(
        kernel,
        out_shape=(jax.ShapeDtypeStruct((B, S, n_heads * d_v), q.dtype),
                   jax.ShapeDtypeStruct((B, n_heads, S, S), attn_dtype)),
        grid=(B, n_heads // hg, S // tq),
        in_specs=[
            pl.BlockSpec((1, tq, hg * d_k), lambda b, h, i: (b, i, h)),
            # K/V constant along the inner q-tile axis -> fetched once per head
            # group per batch element and kept resident, single-buffered.
            _resident_spec((1, S, hg * d_k), lambda b, h, i: (b, 0, h)),
            _resident_spec((1, S, hg * d_v), lambda b, h, i: (b, 0, h)),
        ],
        out_specs=(
            pl.BlockSpec((1, tq, hg * d_v), lambda b, h, i: (b, i, h)),
            pl.BlockSpec((1, hg, tq, S), lambda b, h, i: (b, h, i, 0)),
        ),
        compiler_params=_compiler_params(("parallel", "parallel", "parallel")),
    )(q, k, v)


# ---------------------------------------------------------------------------
# Kernel 3: fused output projection + residual add + LayerNorm, tiled over rows
# with the full d_model last dim so the mean/var reduction stays in-block.
# TODO(synk): tile the (n_v, d_model) weight for very large d_model (as kernel 1).
# ---------------------------------------------------------------------------
def _out_ln_kernel(ctx_ref, w_ref, b_ref, res_ref, g_ref, beta_ref, o_ref, *, eps):
    y = (jnp.dot(ctx_ref[...], w_ref[...], preferred_element_type=jnp.float32)
         + b_ref[...] + res_ref[...].astype(jnp.float32))
    mean = jnp.mean(y, axis=-1, keepdims=True)
    var = jnp.mean(jnp.square(y - mean), axis=-1, keepdims=True)
    norm = (y - mean) * jax.lax.rsqrt(var + eps)
    o_ref[...] = (norm * g_ref[...] + beta_ref[...]).astype(o_ref.dtype)


def out_proj_layernorm(ctx2d, w, b, res2d, gamma, beta, eps=1e-5):
    M, n_v = ctx2d.shape
    d_model = w.shape[1]
    isz = ctx2d.dtype.itemsize

    def bytes_of(tm):
        return (2 * tm * n_v * isz + 2 * tm * d_model * isz   # ctx + residual tiles
                + n_v * d_model * isz                         # resident weight
                + 2 * tm * d_model * isz                      # output tiles
                + 3 * tm * d_model * 4)                       # f32 temporaries

    tm = _pick_tile(M, bytes_of, _tile_budget())
    return pl.pallas_call(
        functools.partial(_out_ln_kernel, eps=eps),
        out_shape=jax.ShapeDtypeStruct((M, d_model), ctx2d.dtype),
        grid=(M // tm,),
        in_specs=[
            pl.BlockSpec((tm, n_v), lambda i: (i, 0)),
            _resident_spec((n_v, d_model), lambda i: (0, 0)),
            _resident_spec((1, d_model), lambda i: (0, 0)),
            pl.BlockSpec((tm, d_model), lambda i: (i, 0)),
            _resident_spec((1, d_model), lambda i: (0, 0)),
            _resident_spec((1, d_model), lambda i: (0, 0)),
        ],
        out_specs=pl.BlockSpec((tm, d_model), lambda i: (i, 0)),
        compiler_params=_compiler_params(("parallel",)),
    )(ctx2d, w, b.reshape(1, d_model), res2d,
      gamma.reshape(1, d_model), beta.reshape(1, d_model))


# ---------------------------------------------------------------------------
# Full MultiHeadAttention forward
# ---------------------------------------------------------------------------
def multi_head_attention(Q, K, V, params, n_heads, d_k, d_v, attn_dtype=None):
    B, S, d_model = Q.shape
    M = B * S
    n_q = n_heads * d_k
    n_v = n_heads * d_v

    fused = (Q is K) and (K is V)          # self-attention: single fused QKV matmul
    q2d, k2d, v2d = qkv_projection(
        Q.reshape(M, d_model), K.reshape(M, d_model), V.reshape(M, d_model),
        params["wq"], params["bq"], params["wk"], params["bk"],
        params["wv"], params["bv"], fused=fused)

    # Row reshapes only (free) — heads remain packed in the last dim.
    ctx, attn = attention(q2d.reshape(B, S, n_q), k2d.reshape(B, S, n_q),
                          v2d.reshape(B, S, n_v), n_heads, d_k, d_v,
                          attn_dtype=attn_dtype)

    out = out_proj_layernorm(ctx.reshape(M, n_v), params["wo"], params["bo"],
                             Q.reshape(M, d_model),
                             params["gamma"], params["beta"])
    return out.reshape(B, S, d_model), attn


# ---------------------------------------------------------------------------
# Deterministic parameter init (mimics nn.Linear U(-1/sqrt(fan_in), +...))
# ---------------------------------------------------------------------------
def init_params(key, d_model, d_k, d_v, n_heads):
    ks = jax.random.split(key, 8)

    def lin(kw, kb, fan_in, fan_out):
        bound = 1.0 / math.sqrt(fan_in)
        w = jax.random.uniform(kw, (fan_in, fan_out), jnp.float32, -bound, bound)
        b = jax.random.uniform(kb, (fan_out,), jnp.float32, -bound, bound)
        return w, b

    wq, bq = lin(ks[0], ks[1], d_model, d_k * n_heads)
    wk, bk = lin(ks[2], ks[3], d_model, d_k * n_heads)
    wv, bv = lin(ks[4], ks[5], d_model, d_v * n_heads)
    wo, bo = lin(ks[6], ks[7], n_heads * d_v, d_model)
    return dict(wq=wq, bq=bq, wk=wk, bk=bk, wv=wv, bv=bv, wo=wo, bo=bo,
                gamma=jnp.ones((d_model,), jnp.float32),
                beta=jnp.zeros((d_model,), jnp.float32))


# ---------------------------------------------------------------------------
# Pure-JAX reference for correctness check
# ---------------------------------------------------------------------------
def reference(Q, K, V, p, n_heads, d_k, d_v):
    B, S, d_model = Q.shape
    q = (Q @ p["wq"] + p["bq"]).reshape(B, S, n_heads, d_k).transpose(0, 2, 1, 3)
    k = (K @ p["wk"] + p["bk"]).reshape(B, S, n_heads, d_k).transpose(0, 2, 1, 3)
    v = (V @ p["wv"] + p["bv"]).reshape(B, S, n_heads, d_v).transpose(0, 2, 1, 3)
    scores = jnp.einsum("bhqd,bhkd->bhqk", q, k) / math.sqrt(d_k)
    attn = jax.nn.softmax(scores, axis=-1)
    ctx = jnp.einsum("bhqk,bhkd->bhqd", attn, v)
    ctx = ctx.transpose(0, 2, 1, 3).reshape(B, S, n_heads * d_v)
    y = ctx @ p["wo"] + p["bo"] + Q
    mean = jnp.mean(y, axis=-1, keepdims=True)
    var = jnp.mean((y - mean) ** 2, axis=-1, keepdims=True)
    out = (y - mean) / jnp.sqrt(var + 1e-5) * p["gamma"] + p["beta"]
    return out, attn


if __name__ == "__main__":
    B, S, d_model = 2, 8, 32
    n_heads, d_k, d_v = 4, 8, 8

    key = jax.random.PRNGKey(0)
    kq, kk, kv, kp = jax.random.split(key, 4)
    Q = jax.random.normal(kq, (B, S, d_model), jnp.float32)
    K = jax.random.normal(kk, (B, S, d_model), jnp.float32)
    V = jax.random.normal(kv, (B, S, d_model), jnp.float32)
    params = init_params(kp, d_model, d_k, d_v, n_heads)

    # Cross-attention path (three separate projection matmuls).
    out, attn = multi_head_attention(Q, K, V, params, n_heads, d_k, d_v)
    jax.block_until_ready((out, attn))
    out_ref, attn_ref = reference(Q, K, V, params, n_heads, d_k, d_v)
    assert jnp.allclose(out, out_ref, atol=2e-3, rtol=2e-3)
    assert jnp.allclose(attn, attn_ref, atol=2e-3, rtol=2e-3)

    # Self-attention path exercises the fused single-matmul QKV projection.
    out_sa, attn_sa = multi_head_attention(Q, Q, Q, params, n_heads, d_k, d_v)
    jax.block_until_ready((out_sa, attn_sa))
    out_sa_ref, attn_sa_ref = reference(Q, Q, Q, params, n_heads, d_k, d_v)
    assert jnp.allclose(out_sa, out_sa_ref, atol=2e-3, rtol=2e-3)
    assert jnp.allclose(attn_sa, attn_sa_ref, atol=2e-3, rtol=2e-3)

    print("KERNEL_OK")
</pallas_src>

<mosaic_0001>
module attributes {stable_mosaic.version = 11 : i64} {
  func.func @_qkv_proj_kernel(%arg0: i32, %arg1: memref<16x32xf32, #tpu.memory_space<vmem>>, %arg2: memref<16x32xf32, #tpu.memory_space<vmem>>, %arg3: memref<16x32xf32, #tpu.memory_space<vmem>>, %arg4: memref<32x32xf32, #tpu.memory_space<vmem>>, %arg5: memref<32x32xf32, #tpu.memory_space<vmem>>, %arg6: memref<32x32xf32, #tpu.memory_space<vmem>>, %arg7: memref<1x32xf32, #tpu.memory_space<vmem>>, %arg8: memref<1x32xf32, #tpu.memory_space<vmem>>, %arg9: memref<1x32xf32, #tpu.memory_space<vmem>>, %arg10: memref<16x32xf32, #tpu.memory_space<vmem>>, %arg11: memref<16x32xf32, #tpu.memory_space<vmem>>, %arg12: memref<16x32xf32, #tpu.memory_space<vmem>>) attributes {dimension_semantics = [#tpu.dimension_semantics<parallel>], iteration_bounds = array<i64: 1>, scalar_prefetch = 0 : i64, scratch_operands = 0 : i64, tpu.core_type = #tpu.core_type<tc>, window_params = [{transform_indices = @transform_0, window_bounds = array<i64: 16, 32>}, {transform_indices = @transform_1, window_bounds = array<i64: 16, 32>}, {transform_indices = @transform_2, window_bounds = array<i64: 16, 32>}, {pipeline_mode = #tpu.pipeline_mode<synchronous>, transform_indices = @transform_3, window_bounds = array<i64: 32, 32>}, {pipeline_mode = #tpu.pipeline_mode<synchronous>, transform_indices = @transform_4, window_bounds = array<i64: 32, 32>}, {pipeline_mode = #tpu.pipeline_mode<synchronous>, transform_indices = @transform_5, window_bounds = array<i64: 32, 32>}, {pipeline_mode = #tpu.pipeline_mode<synchronous>, transform_indices = @transform_6, window_bounds = array<i64: 1, 32>}, {pipeline_mode = #tpu.pipeline_mode<synchronous>, transform_indices = @transform_7, window_bounds = array<i64: 1, 32>}, {pipeline_mode = #tpu.pipeline_mode<synchronous>, transform_indices = @transform_8, window_bounds = array<i64: 1, 32>}, {transform_indices = @transform_9, window_bounds = array<i64: 16, 32>}, {transform_indices = @transform_10, window_bounds = array<i64: 16, 32>}, {transform_indices = @transform_11, window_bounds = array<i64: 16, 32>}]} {
    %c0 = arith.constant 0 : index
    %c0_0 = arith.constant 0 : index
    %0 = vector.load %arg1[%c0, %c0_0] : memref<16x32xf32, #tpu.memory_space<vmem>>, vector<16x32xf32>
    %c0_1 = arith.constant 0 : index
    %c0_2 = arith.constant 0 : index
    %1 = vector.load %arg4[%c0_1, %c0_2] : memref<32x32xf32, #tpu.memory_space<vmem>>, vector<32x32xf32>
    %cst = arith.constant dense<0.000000e+00> : vector<16x32xf32>
    %2 = tpu.matmul %0, %1, %cst {dimension_numbers = #tpu.dot_dimension_numbers<[1], [0], [0], [1], [0, 0, 1, 1], [], []>} : vector<16x32xf32>, vector<32x32xf32>, vector<16x32xf32> -> vector<16x32xf32>
    %c0_3 = arith.constant 0 : index
    %c0_4 = arith.constant 0 : index
    %3 = vector.load %arg7[%c0_3, %c0_4] : memref<1x32xf32, #tpu.memory_space<vmem>>, vector<1x32xf32>
    %4 = vector.broadcast %3 : vector<1x32xf32> to vector<16x32xf32>
    %5 = arith.addf %2, %4 : vector<16x32xf32>
    %c0_5 = arith.constant 0 : index
    %c0_6 = arith.constant 0 : index
    %6 = vector.load %arg10[%c0_5, %c0_6] : memref<16x32xf32, #tpu.memory_space<vmem>>, vector<16x32xf32>
    tpu.vector_store %arg10[%c0_5, %c0_6], %5 {strides = array<i32>} : memref<16x32xf32, #tpu.memory_space<vmem>>, vector<16x32xf32>,
    %c0_7 = arith.constant 0 : index
    %c0_8 = arith.constant 0 : index
    %7 = vector.load %arg2[%c0_7, %c0_8] : memref<16x32xf32, #tpu.memory_space<vmem>>, vector<16x32xf32>
    %c0_9 = arith.constant 0 : index
    %c0_10 = arith.constant 0 : index
    %8 = vector.load %arg5[%c0_9, %c0_10] : memref<32x32xf32, #tpu.memory_space<vmem>>, vector<32x32xf32>
    %cst_11 = arith.constant dense<0.000000e+00> : vector<16x32xf32>
    %9 = tpu.matmul %7, %8, %cst_11 {dimension_numbers = #tpu.dot_dimension_numbers<[1], [0], [0], [1], [0, 0, 1, 1], [], []>} : vector<16x32xf32>, vector<32x32xf32>, vector<16x32xf32> -> vector<16x32xf32>
    %c0_12 = arith.constant 0 : index
    %c0_13 = arith.constant 0 : index
    %10 = vector.load %arg8[%c0_12, %c0_13] : memref<1x32xf32, #tpu.memory_space<vmem>>, vector<1x32xf32>
    %11 = vector.broadcast %10 : vector<1x32xf32> to vector<16x32xf32>
    %12 = arith.addf %9, %11 : vector<16x32xf32>
    %c0_14 = arith.constant 0 : index
    %c0_15 = arith.constant 0 : index
    %13 = vector.load %arg11[%c0_14, %c0_15] : memref<16x32xf32, #tpu.memory_space<vmem>>, vector<16x32xf32>
    tpu.vector_store %arg11[%c0_14, %c0_15], %12 {strides = array<i32>} : memref<16x32xf32, #tpu.memory_space<vmem>>, vector<16x32xf32>,
    %c0_16 = arith.constant 0 : index
    %c0_17 = arith.constant 0 : index
    %14 = vector.load %arg3[%c0_16, %c0_17] : memref<16x32xf32, #tpu.memory_space<vmem>>, vector<16x32xf32>
    %c0_18 = arith.constant 0 : index
    %c0_19 = arith.constant 0 : index
    %15 = vector.load %arg6[%c0_18, %c0_19] : memref<32x32xf32, #tpu.memory_space<vmem>>, vector<32x32xf32>
    %cst_20 = arith.constant dense<0.000000e+00> : vector<16x32xf32>
    %16 = tpu.matmul %14, %15, %cst_20 {dimension_numbers = #tpu.dot_dimension_numbers<[1], [0], [0], [1], [0, 0, 1, 1], [], []>} : vector<16x32xf32>, vector<32x32xf32>, vector<16x32xf32> -> vector<16x32xf32>
    %c0_21 = arith.constant 0 : index
    %c0_22 = arith.constant 0 : index
    %17 = vector.load %arg9[%c0_21, %c0_22] : memref<1x32xf32, #tpu.memory_space<vmem>>, vector<1x32xf32>
    %18 = vector.broadcast %17 : vector<1x32xf32> to vector<16x32xf32>
    %19 = arith.addf %16, %18 : vector<16x32xf32>
    %c0_23 = arith.constant 0 : index
    %c0_24 = arith.constant 0 : index
    %20 = vector.load %arg12[%c0_23, %c0_24] : memref<16x32xf32, #tpu.memory_space<vmem>>, vector<16x32xf32>
    tpu.vector_store %arg12[%c0_23, %c0_24], %19 {strides = array<i32>} : memref<16x32xf32, #tpu.memory_space<vmem>>, vector<16x32xf32>,
    return
  }
  func.func @transform_0(%arg0: i32) -> (i32, i32) {
    %c0_i32 = arith.constant 0 : i32
    %c0_i32_0 = arith.constant 0 : i32
    return %arg0, %c0_i32 : i32, i32
  }
  func.func @transform_1(%arg0: i32) -> (i32, i32) {
    %c0_i32 = arith.constant 0 : i32
    %c0_i32_0 = arith.constant 0 : i32
    return %arg0, %c0_i32 : i32, i32
  }
  func.func @transform_2(%arg0: i32) -> (i32, i32) {
    %c0_i32 = arith.constant 0 : i32
    %c0_i32_0 = arith.constant 0 : i32
    return %arg0, %c0_i32 : i32, i32
  }
  func.func @transform_3(%arg0: i32) -> (i32, i32) {
    %c0_i32 = arith.constant 0 : i32
    %c0_i32_0 = arith.constant 0 : i32
    %c0_i32_1 = arith.constant 0 : i32
    return %c0_i32, %c0_i32_0 : i32, i32
  }
  func.func @transform_4(%arg0: i32) -> (i32, i32) {
    %c0_i32 = arith.constant 0 : i32
    %c0_i32_0 = arith.constant 0 : i32
    %c0_i32_1 = arith.constant 0 : i32
    return %c0_i32, %c0_i32_0 : i32, i32
  }
  func.func @transform_5(%arg0: i32) -> (i32, i32) {
    %c0_i32 = arith.constant 0 : i32
    %c0_i32_0 = arith.constant 0 : i32
    %c0_i32_1 = arith.constant 0 : i32
    return %c0_i32, %c0_i32_0 : i32, i32
  }
  func.func @transform_6(%arg0: i32) -> (i32, i32) {
    %c0_i32 = arith.constant 0 : i32
    %c0_i32_0 = arith.constant 0 : i32
    %c0_i32_1 = arith.constant 0 : i32
    return %c0_i32, %c0_i32_0 : i32, i32
  }
  func.func @transform_7(%arg0: i32) -> (i32, i32) {
    %c0_i32 = arith.constant 0 : i32
    %c0_i32_0 = arith.constant 0 : i32
    %c0_i32_1 = arith.constant 0 : i32
    return %c0_i32, %c0_i32_0 : i32, i32
  }
  func.func @transform_8(%arg0: i32) -> (i32, i32) {
    %c0_i32 = arith.constant 0 : i32
    %c0_i32_0 = arith.constant 0 : i32
    %c0_i32_1 = arith.constant 0 : i32
    return %c0_i32, %c0_i32_0 : i32, i32
  }
  func.func @transform_9(%arg0: i32) -> (i32, i32) {
    %c0_i32 = arith.constant 0 : i32
    %c0_i32_0 = arith.constant 0 : i32
    return %arg0, %c0_i32 : i32, i32
  }
  func.func @transform_10(%arg0: i32) -> (i32, i32) {
    %c0_i32 = arith.constant 0 : i32
    %c0_i32_0 = arith.constant 0 : i32
    return %arg0, %c0_i32 : i32, i32
  }
  func.func @transform_11(%arg0: i32) -> (i32, i32) {
    %c0_i32 = arith.constant 0 : i32
    %c0_i32_0 = arith.constant 0 : i32
    return %arg0, %c0_i32 : i32, i32
  }
}

</mosaic_0001>

<llo_original>
// kernel: tpu_custom_call.1
$region0: #{tpu_custom_call.1}
  #allocation0 [shape = 'u32[]', space=smem, size = 0x4, offset = 0x4, fixed_abs, tag = 'smem constant byte address 0x4 - core index']
  #allocation1 [shape = 'u32[144,128]{1,0:T(1,128)}', space=vmem, size = 0x12000, scoped, tag = 'internal scratch']
  %s0 = inlined_call_operand.hbm [shape: f32[16,32], index: 0, kind: input, shape index: {}]
  %s1 = inlined_call_operand.hbm [shape: f32[16,32], index: 1, kind: input, shape index: {}]
  %s2 = inlined_call_operand.hbm [shape: f32[16,32], index: 2, kind: input, shape index: {}]
  %s3 = inlined_call_operand.hbm [shape: f32[32,32], index: 3, kind: input, shape index: {}]
  %s4 = inlined_call_operand.hbm [shape: f32[32,32], index: 4, kind: input, shape index: {}]
  %s5 = inlined_call_operand.hbm [shape: f32[32,32], index: 5, kind: input, shape index: {}]
  %s6 = inlined_call_operand.hbm [shape: f32[1,32], index: 6, kind: input, shape index: {}]
  %s7 = inlined_call_operand.hbm [shape: f32[1,32], index: 7, kind: input, shape index: {}]
  %s8 = inlined_call_operand.hbm [shape: f32[1,32], index: 8, kind: input, shape index: {}]
  %s9 = inlined_call_operand.hbm [shape: f32[16,32], index: 9, kind: output, shape index: {0}]
  %s10 = inlined_call_operand.hbm [shape: f32[16,32], index: 10, kind: output, shape index: {1}]
  %s11 = inlined_call_operand.hbm [shape: f32[16,32], index: 11, kind: output, shape index: {2}]
  %12 = xla_tuple %s9, %s10, %s11
  %s13 = sld [smem:[#allocation0]]
  $region98: #{tpu_custom_call.1} parent=0
    _
  %s15 = ssub.s32 1, %s13
  %s16 = scalar_select 0, %s15, %s13
  $region1: #{tpu_custom_call.1} parent=0
    #allocation2 [shape = 'u8[8192]{0}', space=vmem, size = 0x2000, scoped, tag = 'input window, operand 0, single buffered']
    #allocation3 [shape = 's32[1]{0}', space=sflag, size = 0x4, scoped, tag = 'scoped memory for tpu_custom_call.1']
    #allocation4 [shape = 's32[1]{0}', space=sflag, size = 0x4, scoped, tag = 'scoped memory for tpu_custom_call.1']
    #allocation5 [shape = 'u8[8192]{0}', space=vmem, size = 0x2000, scoped, tag = 'input window, operand 1, single buffered']
    #allocation6 [shape = 's32[1]{0}', space=sflag, size = 0x4, scoped, tag = 'scoped memory for tpu_custom_call.1']
    #allocation7 [shape = 'u8[8192]{0}', space=vmem, size = 0x2000, scoped, tag = 'input window, operand 2, single buffered']
    #allocation8 [shape = 'u8[16384]{0}', space=vmem, size = 0x4000, scoped, tag = 'input window, operand 3, single buffered']
    #allocation9 [shape = 's32[1]{0}', space=sflag, size = 0x4, scoped, tag = 'scoped memory for tpu_custom_call.1']
    #allocation10 [shape = 'u8[16384]{0}', space=vmem, size = 0x4000, scoped, tag = 'input window, operand 4, single buffered']
    #allocation11 [shape = 'u8[16384]{0}', space=vmem, size = 0x4000, scoped, tag = 'input window, operand 5, single buffered']
    #allocation12 [shape = 's32[1]{0}', space=sflag, size = 0x4, scoped, tag = 'scoped memory for tpu_custom_call.1']
    #allocation13 [shape = 'u8[512]{0}', space=vmem, size = 0x400, scoped, tag = 'input window, operand 6, single buffered']
    #allocation14 [shape = 'u8[512]{0}', space=vmem, size = 0x400, scoped, tag = 'input window, operand 7, single buffered']
    #allocation15 [shape = 's32[1]{0}', space=sflag, size = 0x4, scoped, tag = 'scoped memory for tpu_custom_call.1']
    #allocation16 [shape = 'u8[512]{0}', space=vmem, size = 0x400, scoped, tag = 'input window, operand 8, single buffered']
    #allocation17 [shape = 'u8[8192]{0}', space=vmem, size = 0x2000, scoped, tag = 'output window, operand 0, single buffered']
    #allocation18 [shape = 'u8[8192]{0}', space=vmem, size = 0x2000, scoped, tag = 'output window, operand 1, single buffered']
    #allocation19 [shape = 's32[1]{0}', space=sflag, size = 0x4, scoped, tag = 'scoped memory for tpu_custom_call.1']
    #allocation20 [shape = 'u8[8192]{0}', space=vmem, size = 0x2000, scoped, tag = 'output window, operand 2, single buffered']
    %17 = vsyncpa [#allocation3], 0
    %18 = vsyncpa [#allocation6], 0
    %19 = vsyncpa [#allocation9], 0
    %20 = vsyncpa [#allocation12], 0
    %21 = vsyncpa [#allocation15], 0
    %22 = vsyncpa [#allocation4], 0
    %23 = vsyncpa [#allocation19], 0
    // Predicated region
    $region2: #{tpu_custom_call.1} parent=1 // pred_check
      _
    $region3: #{tpu_custom_call.1} parent=1 // pred_check_branch
      %25 = sbr.rel (0) target = $region5
    $region4: #{tpu_custom_call.1} parent=1 // pred_region
      %s27 = ssub.s32 256, 256
      %28 = vsyncadd [#allocation3], %s27
      %s29 = sshll.u32 [#allocation2], 4
      %s30 = int_to_ptr.vmem [resolvable:$true] %s29
      %35 = dma.hbm_to_vmem [thread:$0]  %s0, 256, %s30, [#allocation3], 128, 128, 8
    $region5: #{tpu_custom_call.1} parent=1 // pred_fallthru
      _
    // Predicated region
    $region6: #{tpu_custom_call.1} parent=1 // pred_check
      _
    $region7: #{tpu_custom_call.1} parent=1 // pred_check_branch
      %37 = sbr.rel (0) target = $region9
    $region8: #{tpu_custom_call.1} parent=1 // pred_region
      %s39 = ssub.s32 256, 256
      %40 = vsyncadd [#allocation6], %s39
      %s41 = sshll.u32 [#allocation5], 4
      %s42 = int_to_ptr.vmem [resolvable:$true] %s41
      %47 = dma.hbm_to_vmem [thread:$0]  %s1, 256, %s42, [#allocation6], 128, 128, 8
    $region9: #{tpu_custom_call.1} parent=1 // pred_fallthru
      _
    // Predicated region
    $region10: #{tpu_custom_call.1} parent=1 // pred_check
      _
    $region11: #{tpu_custom_call.1} parent=1 // pred_check_branch
      %49 = sbr.rel (0) target = $region13
    $region12: #{tpu_custom_call.1} parent=1 // pred_region
      %s51 = ssub.s32 256, 256
      %52 = vsyncadd [#allocation6], %s51
      %s53 = sshll.u32 [#allocation7], 4
      %s54 = int_to_ptr.vmem [resolvable:$true] %s53
      %59 = dma.hbm_to_vmem [thread:$0]  %s2, 256, %s54, [#allocation6], 128, 128, 8
    $region13: #{tpu_custom_call.1} parent=1 // pred_fallthru
      _
    // Predicated region
    $region14: #{tpu_custom_call.1} parent=1 // pred_check
      _
    $region15: #{tpu_custom_call.1} parent=1 // pred_check_branch
      %61 = sbr.rel (0) target = $region17
    $region16: #{tpu_custom_call.1} parent=1 // pred_region
      %s63 = ssub.s32 512, 512
      %64 = vsyncadd [#allocation9], %s63
      %s65 = sshll.u32 [#allocation8], 4
      %s66 = int_to_ptr.vmem [resolvable:$true] %s65
      %71 = dma.hbm_to_vmem [thread:$0]  %s3, 512, %s66, [#allocation9], 128, 128, 8
    $region17: #{tpu_custom_call.1} parent=1 // pred_fallthru
      _
    // Predicated region
    $region18: #{tpu_custom_call.1} parent=1 // pred_check
      _
    $region19: #{tpu_custom_call.1} parent=1 // pred_check_branch
      %73 = sbr.rel (0) target = $region21
    $region20: #{tpu_custom_call.1} parent=1 // pred_region
      %s75 = ssub.s32 512, 512
      %76 = vsyncadd [#allocation9], %s75
      %s77 = sshll.u32 [#allocation10], 4
      %s78 = int_to_ptr.vmem [resolvable:$true] %s77
      %83 = dma.hbm_to_vmem [thread:$0]  %s4, 512, %s78, [#allocation9], 128, 128, 8
    $region21: #{tpu_custom_call.1} parent=1 // pred_fallthru
      _
    // Predicated region
    $region22: #{tpu_custom_call.1} parent=1 // pred_check
      _
    $region23: #{tpu_custom_call.1} parent=1 // pred_check_branch
      %85 = sbr.rel (0) target = $region25
    $region24: #{tpu_custom_call.1} parent=1 // pred_region
      %s87 = ssub.s32 512, 512
      %88 = vsyncadd [#allocation12], %s87
      %s89 = sshll.u32 [#allocation11], 4
      %s90 = int_to_ptr.vmem [resolvable:$true] %s89
      %95 = dma.hbm_to_vmem [thread:$0]  %s5, 512, %s90, [#allocation12], 128, 128, 8
    $region25: #{tpu_custom_call.1} parent=1 // pred_fallthru
      _
    // Predicated region
    $region26: #{tpu_custom_call.1} parent=1 // pred_check
      _
    $region27: #{tpu_custom_call.1} parent=1 // pred_check_branch
      %97 = sbr.rel (0) target = $region29
    $region28: #{tpu_custom_call.1} parent=1 // pred_region
      %s99 = ssub.s32 16, 16
      %100 = vsyncadd [#allocation12], %s99
      %s102 = sshll.u32 [#allocation13], 4
      %s103 = int_to_ptr.vmem [resolvable:$true] %s102
      %105 = dma.hbm_to_vmem [thread:$0]  %s6, 16, %s103, [#allocation12]
    $region29: #{tpu_custom_call.1} parent=1 // pred_fallthru
      _
    // Predicated region
    $region30: #{tpu_custom_call.1} parent=1 // pred_check
      _
    $region31: #{tpu_custom_call.1} parent=1 // pred_check_branch
      %107 = sbr.rel (0) target = $region33
    $region32: #{tpu_custom_call.1} parent=1 // pred_region
      %s109 = ssub.s32 16, 16
      %110 = vsyncadd [#allocation15], %s109
      %s112 = sshll.u32 [#allocation14], 4
      %s113 = int_to_ptr.vmem [resolvable:$true] %s112
      %115 = dma.hbm_to_vmem [thread:$0]  %s7, 16, %s113, [#allocation15]
    $region33: #{tpu_custom_call.1} parent=1 // pred_fallthru
      _
    // Predicated region
    $region34: #{tpu_custom_call.1} parent=1 // pred_check
      _
    $region35: #{tpu_custom_call.1} parent=1 // pred_check_branch
      %117 = sbr.rel (0) target = $region37
    $region36: #{tpu_custom_call.1} parent=1 // pred_region
      %s119 = ssub.s32 16, 16
      %120 = vsyncadd [#allocation15], %s119
      %s122 = sshll.u32 [#allocation16], 4
      %s123 = int_to_ptr.vmem [resolvable:$true] %s122
      %125 = dma.hbm_to_vmem [thread:$0]  %s8, 16, %s123, [#allocation15]
    $region37: #{tpu_custom_call.1} parent=1 // pred_fallthru
      _
    // Predicated region
    $region38: #{tpu_custom_call.1} parent=1 // pred_check
      _
    $region39: #{tpu_custom_call.1} parent=1 // pred_check_branch
      %127 = sbr.rel (0) target = $region41
    $region40: #{tpu_custom_call.1} parent=1 // pred_region
      %128 = dma.done [#allocation3], 256
    $region41: #{tpu_custom_call.1} parent=1 // pred_fallthru
      _
    // Predicated region
    $region42: #{tpu_custom_call.1} parent=1 // pred_check
      _
    $region43: #{tpu_custom_call.1} parent=1 // pred_check_branch
      %130 = sbr.rel (0) target = $region45
    $region44: #{tpu_custom_call.1} parent=1 // pred_region
      %131 = dma.done [#allocation6], 256
    $region45: #{tpu_custom_call.1} parent=1 // pred_fallthru
      _
    // Predicated region
    $region46: #{tpu_custom_call.1} parent=1 // pred_check
      _
    $region47: #{tpu_custom_call.1} parent=1 // pred_check_branch
      %133 = sbr.rel (0) target = $region49
    $region48: #{tpu_custom_call.1} parent=1 // pred_region
      %134 = dma.done [#allocation6], 256
    $region49: #{tpu_custom_call.1} parent=1 // pred_fallthru
      _
    // Predicated region
    $region50: #{tpu_custom_call.1} parent=1 // pred_check
      _
    $region51: #{tpu_custom_call.1} parent=1 // pred_check_branch
      %136 = sbr.rel (0) target = $region53
    $region52: #{tpu_custom_call.1} parent=1 // pred_region
      %137 = dma.done [#allocation9], 512
    $region53: #{tpu_custom_call.1} parent=1 // pred_fallthru
      _
    // Predicated region
    $region54: #{tpu_custom_call.1} parent=1 // pred_check
      _
    $region55: #{tpu_custom_call.1} parent=1 // pred_check_branch
      %139 = sbr.rel (0) target = $region57
    $region56: #{tpu_custom_call.1} parent=1 // pred_region
      %140 = dma.done [#allocation9], 512
    $region57: #{tpu_custom_call.1} parent=1 // pred_fallthru
      _
    // Predicated region
    $region58: #{tpu_custom_call.1} parent=1 // pred_check
      _
    $region59: #{tpu_custom_call.1} parent=1 // pred_check_branch
      %142 = sbr.rel (0) target = $region61
    $region60: #{tpu_custom_call.1} parent=1 // pred_region
      %143 = dma.done [#allocation12], 512
    $region61: #{tpu_custom_call.1} parent=1 // pred_fallthru
      _
    // Predicated region
    $region62: #{tpu_custom_call.1} parent=1 // pred_check
      _
    $region63: #{tpu_custom_call.1} parent=1 // pred_check_branch
      %145 = sbr.rel (0) target = $region65
    $region64: #{tpu_custom_call.1} parent=1 // pred_region
      %146 = dma.done [#allocation12], 16
    $region65: #{tpu_custom_call.1} parent=1 // pred_fallthru
      _
    // Predicated region
    $region66: #{tpu_custom_call.1} parent=1 // pred_check
      _
    $region67: #{tpu_custom_call.1} parent=1 // pred_check_branch
      %148 = sbr.rel (0) target = $region69
    $region68: #{tpu_custom_call.1} parent=1 // pred_region
      %149 = dma.done [#allocation15], 16
    $region69: #{tpu_custom_call.1} parent=1 // pred_fallthru
      _
    // Predicated region
    $region70: #{tpu_custom_call.1} parent=1 // pred_check
      _
    $region71: #{tpu_custom_call.1} parent=1 // pred_check_branch
      %151 = sbr.rel (0) target = $region73
    $region72: #{tpu_custom_call.1} parent=1 // pred_region
      %152 = dma.done [#allocation15], 16
    $region73: #{tpu_custom_call.1} parent=1 // pred_fallthru
      _
    %v153 = vld [vmem:[#allocation2] sm:$0xff]
    %v154 = vld [vmem:[#allocation2 + $0x8] sm:$0xff]
    %v155 = vld [vmem:[#allocation8] sm:$0xff]
    %v156 = vld [vmem:[#allocation8 + $0x8] sm:$0xff]
    %v157 = vld [vmem:[#allocation8 + $0x10] sm:$0xff]
    %v158 = vld [vmem:[#allocation8 + $0x18] sm:$0xff]
    %v159 = vld [vmem:[#allocation13] sm:$0x1]
    %v161 = vlaneseq
    %v162 = vshrl.u32 %v161, 7
    %v163 = vsub.s32 0, %v162
    %v164 = vrot.slane %v159, %v163
    %vm166 = vcmask 261120
    %v168 = vsel %vm166, %v153, 0
    %v171 = vsel %vm166, %v154, 0
    %173 = vmatprep.subr.mxu0 0.0
    %174 = vmatpush1.msra.mxu0 %v155
    %175 = vmatprep.subr.mxu0 0.0
    %176 = vmatpush1.msra.mxu0 %v156
    %177 = vmatprep.subr.mxu0 0.0
    %178 = vmatpush1.msra.mxu0 %v157
    %179 = vmatprep.subr.mxu0 0.0
    %180 = vmatpush1.msra.mxu0 %v158
    %181 = vmatprep.subr.mxu0 0.0
    %182 = vmatpush1.msra.mxu0 0.0
    %183 = vmatprep.subr.mxu0 0.0
    %184 = vmatpush1.msra.mxu0 0.0
    %185 = vmatprep.subr.mxu0 0.0
    %186 = vmatpush1.msra.mxu0 0.0
    %187 = vmatprep.subr.mxu0 0.0
    %188 = vmatpush1.msra.mxu0 0.0
    %189 = vmatprep.subr.mxu0 0.0
    %190 = vmatpush1.msra.mxu0 0.0
    %191 = vmatprep.subr.mxu0 0.0
    %192 = vmatpush1.msra.mxu0 0.0
    %193 = vmatprep.subr.mxu0 0.0
    %194 = vmatpush1.msra.mxu0 0.0
    %195 = vmatprep.subr.mxu0 0.0
    %196 = vmatpush1.msra.mxu0 0.0
    %197 = vmatprep.subr.mxu0 0.0
    %198 = vmatpush1.msra.mxu0 0.0
    %199 = vmatprep.subr.mxu0 0.0
    %200 = vmatpush1.msra.mxu0 0.0
    %201 = vmatprep.subr.mxu0 0.0
    %202 = vmatpush1.msra.mxu0 0.0
    %203 = vmatprep.subr.mxu0 0.0
    %204 = vmatpush1.msra.mxu0 0.0
    %205 = vmatprep.subr.mxu0 0.0
    %206 = vmatpush1.msra.mxu0 0.0
    %207 = vmatprep.subr.mxu0 0.0
    %208 = vmatpush1.msra.mxu0 0.0
    %209 = vmatprep.subr.mxu0 0.0
    %210 = vmatpush1.msra.mxu0 0.0
    %211 = vmatprep.subr.mxu0 0.0
    %212 = vmatpush1.msra.mxu0 0.0
    %213 = vmatprep.subr.mxu0 0.0
    %214 = vmatpush1.msra.mxu0 0.0
    %215 = vmatprep.subr.mxu0 0.0
    %216 = vmatpush1.msra.mxu0 0.0
    %217 = vmatprep.subr.mxu0 0.0
    %218 = vmatpush1.msra.mxu0 0.0
    %219 = vmatprep.subr.mxu0 0.0
    %220 = vmatpush1.msra.mxu0 0.0
    %221 = vmatprep.subr.mxu0 0.0
    %222 = vmatpush1.msra.mxu0 0.0
    %223 = vmatprep.subr.mxu0 0.0
    %224 = vmatpush1.msra.mxu0 0.0
    %225 = vmatprep.subr.mxu0 0.0
    %226 = vmatpush1.msra.mxu0 0.0
    %227 = vmatprep.subr.mxu0 0.0
    %228 = vmatpush1.msra.mxu0 0.0
    %229 = vmatprep.subr.mxu0 0.0
    %230 = vmatpush1.msra.mxu0 0.0
    %231 = vmatprep.subr.mxu0 0.0
    %232 = vmatpush1.msra.mxu0 0.0
    %233 = vmatprep.subr.mxu0 0.0
    %234 = vmatpush1.msra.mxu0 0.0
    %235 = vmatprep.subr.mxu0 0.0
    %236 = vmatpush1.msra.mxu0 0.0
    %237 = vmatprep.mubr.f32.mxu0 0.0
    %238 = vmatmul.mubr.f32.gmra.mrb[0].mxu0 %v168
    %v239 = vpop.f32.mrb[0].mxu0
    %v240 = vadd.f32 %v164, %v239
    %v241 = vpop.f32.mrb[0].mxu0
    %242 = vmatprep.mubr.f32.mxu0 0.0
    %243 = vmatmul.mubr.f32.gmra.mrb[0].mxu0 %v171
    %v244 = vpop.f32.mrb[0].mxu0
    %v245 = vadd.f32 %v164, %v244
    %v246 = vpop.f32.mrb[0].mxu0
    %247 = vdwg.mxu0
    %248 = vst.msk [vmem:[#allocation17] sm:$0xff] %vm166, %v240
    %249 = vst.msk [vmem:[#allocation17 + $0x8] sm:$0xff] %vm166, %v245
    %v250 = vld [vmem:[#allocation5] sm:$0xff]
    %v251 = vld [vmem:[#allocation5 + $0x8] sm:$0xff]
    %v252 = vld [vmem:[#allocation10] sm:$0xff]
    %v253 = vld [vmem:[#allocation10 + $0x8] sm:$0xff]
    %v254 = vld [vmem:[#allocation10 + $0x10] sm:$0xff]
    %v255 = vld [vmem:[#allocation10 + $0x18] sm:$0xff]
    %v256 = vld [vmem:[#allocation14] sm:$0x1]
    %v258 = vlaneseq
    %v259 = vshrl.u32 %v258, 7
    %v260 = vsub.s32 0, %v259
    %v261 = vrot.slane %v256, %v260
    %v264 = vsel %vm166, %v250, 0
    %v267 = vsel %vm166, %v251, 0
    %269 = vmatprep.subr.mxu0 0.0
    %270 = vmatpush1.msra.mxu0 %v252
    %271 = vmatprep.subr.mxu0 0.0
    %272 = vmatpush1.msra.mxu0 %v253
    %273 = vmatprep.subr.mxu0 0.0
    %274 = vmatpush1.msra.mxu0 %v254
    %275 = vmatprep.subr.mxu0 0.0
    %276 = vmatpush1.msra.mxu0 %v255
    %277 = vmatprep.subr.mxu0 0.0
    %278 = vmatpush1.msra.mxu0 0.0
    %279 = vmatprep.subr.mxu0 0.0
    %280 = vmatpush1.msra.mxu0 0.0
    %281 = vmatprep.subr.mxu0 0.0
    %282 = vmatpush1.msra.mxu0 0.0
    %283 = vmatprep.subr.mxu0 0.0
    %284 = vmatpush1.msra.mxu0 0.0
    %285 = vmatprep.subr.mxu0 0.0
    %286 = vmatpush1.msra.mxu0 0.0
    %287 = vmatprep.subr.mxu0 0.0
    %288 = vmatpush1.msra.mxu0 0.0
    %289 = vmatprep.subr.mxu0 0.0
    %290 = vmatpush1.msra.mxu0 0.0
    %291 = vmatprep.subr.mxu0 0.0
    %292 = vmatpush1.msra.mxu0 0.0
    %293 = vmatprep.subr.mxu0 0.0
    %294 = vmatpush1.msra.mxu0 0.0
    %295 = vmatprep.subr.mxu0 0.0
    %296 = vmatpush1.msra.mxu0 0.0
    %297 = vmatprep.subr.mxu0 0.0
    %298 = vmatpush1.msra.mxu0 0.0
    %299 = vmatprep.subr.mxu0 0.0
    %300 = vmatpush1.msra.mxu0 0.0
    %301 = vmatprep.subr.mxu0 0.0
    %302 = vmatpush1.msra.mxu0 0.0
    %303 = vmatprep.subr.mxu0 0.0
    %304 = vmatpush1.msra.mxu0 0.0
    %305 = vmatprep.subr.mxu0 0.0
    %306 = vmatpush1.msra.mxu0 0.0
    %307 = vmatprep.subr.mxu0 0.0
    %308 = vmatpush1.msra.mxu0 0.0
    %309 = vmatprep.subr.mxu0 0.0
    %310 = vmatpush1.msra.mxu0 0.0
    %311 = vmatprep.subr.mxu0 0.0
    %312 = vmatpush1.msra.mxu0 0.0
    %313 = vmatprep.subr.mxu0 0.0
    %314 = vmatpush1.msra.mxu0 0.0
    %315 = vmatprep.subr.mxu0 0.0
    %316 = vmatpush1.msra.mxu0 0.0
    %317 = vmatprep.subr.mxu0 0.0
    %318 = vmatpush1.msra.mxu0 0.0
    %319 = vmatprep.subr.mxu0 0.0
    %320 = vmatpush1.msra.mxu0 0.0
    %321 = vmatprep.subr.mxu0 0.0
    %322 = vmatpush1.msra.mxu0 0.0
    %323 = vmatprep.subr.mxu0 0.0
    %324 = vmatpush1.msra.mxu0 0.0
    %325 = vmatprep.subr.mxu0 0.0
    %326 = vmatpush1.msra.mxu0 0.0
    %327 = vmatprep.subr.mxu0 0.0
    %328 = vmatpush1.msra.mxu0 0.0
    %329 = vmatprep.subr.mxu0 0.0
    %330 = vmatpush1.msra.mxu0 0.0
    %331 = vmatprep.subr.mxu0 0.0
    %332 = vmatpush1.msra.mxu0 0.0
    %333 = vmatprep.mubr.f32.mxu0 0.0
    %334 = vmatmul.mubr.f32.gmra.mrb[0].mxu0 %v264
    %v335 = vpop.f32.mrb[0].mxu0
    %v336 = vadd.f32 %v261, %v335
    %v337 = vpop.f32.mrb[0].mxu0
    %338 = vmatprep.mubr.f32.mxu0 0.0
    %339 = vmatmul.mubr.f32.gmra.mrb[0].mxu0 %v267
    %v340 = vpop.f32.mrb[0].mxu0
    %v341 = vadd.f32 %v261, %v340
    %v342 = vpop.f32.mrb[0].mxu0
    %343 = vdwg.mxu0
    %344 = vst.msk [vmem:[#allocation18] sm:$0xff] %vm166, %v336
    %345 = vst.msk [vmem:[#allocation18 + $0x8] sm:$0xff] %vm166, %v341
    %v346 = vld [vmem:[#allocation7] sm:$0xff]
    %v347 = vld [vmem:[#allocation7 + $0x8] sm:$0xff]
    %v348 = vld [vmem:[#allocation11] sm:$0xff]
    %v349 = vld [vmem:[#allocation11 + $0x8] sm:$0xff]
    %v350 = vld [vmem:[#allocation11 + $0x10] sm:$0xff]
    %v351 = vld [vmem:[#allocation11 + $0x18] sm:$0xff]
    %v352 = vld [vmem:[#allocation16] sm:$0x1]
    %v354 = vlaneseq
    %v355 = vshrl.u32 %v354, 7
    %v356 = vsub.s32 0, %v355
    %v357 = vrot.slane %v352, %v356
    %v360 = vsel %vm166, %v346, 0
    %v363 = vsel %vm166, %v347, 0
    %365 = vmatprep.subr.mxu0 0.0
    %366 = vmatpush1.msra.mxu0 %v348
    %367 = vmatprep.subr.mxu0 0.0
    %368 = vmatpush1.msra.mxu0 %v349
    %369 = vmatprep.subr.mxu0 0.0
    %370 = vmatpush1.msra.mxu0 %v350
    %371 = vmatprep.subr.mxu0 0.0
    %372 = vmatpush1.msra.mxu0 %v351
    %373 = vmatprep.subr.mxu0 0.0
    %374 = vmatpush1.msra.mxu0 0.0
    %375 = vmatprep.subr.mxu0 0.0
    %376 = vmatpush1.msra.mxu0 0.0
    %377 = vmatprep.subr.mxu0 0.0
    %378 = vmatpush1.msra.mxu0 0.0
    %379 = vmatprep.subr.mxu0 0.0
    %380 = vmatpush1.msra.mxu0 0.0
    %381 = vmatprep.subr.mxu0 0.0
    %382 = vmatpush1.msra.mxu0 0.0
    %383 = vmatprep.subr.mxu0 0.0
    %384 = vmatpush1.msra.mxu0 0.0
    %385 = vmatprep.subr.mxu0 0.0
    %386 = vmatpush1.msra.mxu0 0.0
    %387 = vmatprep.subr.mxu0 0.0
    %388 = vmatpush1.msra.mxu0 0.0
    %389 = vmatprep.subr.mxu0 0.0
    %390 = vmatpush1.msra.mxu0 0.0
    %391 = vmatprep.subr.mxu0 0.0
    %392 = vmatpush1.msra.mxu0 0.0
    %393 = vmatprep.subr.mxu0 0.0
    %394 = vmatpush1.msra.mxu0 0.0
    %395 = vmatprep.subr.mxu0 0.0
    %396 = vmatpush1.msra.mxu0 0.0
    %397 = vmatprep.subr.mxu0 0.0
    %398 = vmatpush1.msra.mxu0 0.0
    %399 = vmatprep.subr.mxu0 0.0
    %400 = vmatpush1.msra.mxu0 0.0
    %401 = vmatprep.subr.mxu0 0.0
    %402 = vmatpush1.msra.mxu0 0.0
    %403 = vmatprep.subr.mxu0 0.0
    %404 = vmatpush1.msra.mxu0 0.0
    %405 = vmatprep.subr.mxu0 0.0
    %406 = vmatpush1.msra.mxu0 0.0
    %407 = vmatprep.subr.mxu0 0.0
    %408 = vmatpush1.msra.mxu0 0.0
    %409 = vmatprep.subr.mxu0 0.0
    %410 = vmatpush1.msra.mxu0 0.0
    %411 = vmatprep.subr.mxu0 0.0
    %412 = vmatpush1.msra.mxu0 0.0
    %413 = vmatprep.subr.mxu0 0.0
    %414 = vmatpush1.msra.mxu0 0.0
    %415 = vmatprep.subr.mxu0 0.0
    %416 = vmatpush1.msra.mxu0 0.0
    %417 = vmatprep.subr.mxu0 0.0
    %418 = vmatpush1.msra.mxu0 0.0
    %419 = vmatprep.subr.mxu0 0.0
    %420 = vmatpush1.msra.mxu0 0.0
    %421 = vmatprep.subr.mxu0 0.0
    %422 = vmatpush1.msra.mxu0 0.0
    %423 = vmatprep.subr.mxu0 0.0
    %424 = vmatpush1.msra.mxu0 0.0
    %425 = vmatprep.subr.mxu0 0.0
    %426 = vmatpush1.msra.mxu0 0.0
    %427 = vmatprep.subr.mxu0 0.0
    %428 = vmatpush1.msra.mxu0 0.0
    %429 = vmatprep.mubr.f32.mxu0 0.0
    %430 = vmatmul.mubr.f32.gmra.mrb[0].mxu0 %v360
    %v431 = vpop.f32.mrb[0].mxu0
    %v432 = vadd.f32 %v357, %v431
    %v433 = vpop.f32.mrb[0].mxu0
    %434 = vmatprep.mubr.f32.mxu0 0.0
    %435 = vmatmul.mubr.f32.gmra.mrb[0].mxu0 %v363
    %v436 = vpop.f32.mrb[0].mxu0
    %v437 = vadd.f32 %v357, %v436
    %v438 = vpop.f32.mrb[0].mxu0
    %439 = vdwg.mxu0
    %440 = vst.msk [vmem:[#allocation20] sm:$0xff] %vm166, %v432
    %441 = vst.msk [vmem:[#allocation20 + $0x8] sm:$0xff] %vm166, %v437
    // Predicated region
    $region74: #{tpu_custom_call.1} parent=1 // pred_check
      _
    $region75: #{tpu_custom_call.1} parent=1 // pred_check_branch
      %443 = sbr.rel (0) target = $region77
    $region76: #{tpu_custom_call.1} parent=1 // pred_region
      %s445 = ssub.s32 256, 256
      %446 = vsyncadd [#allocation4], %s445
      %s447 = sshll.u32 [#allocation17], 4
      %s448 = int_to_ptr.vmem [resolvable:$true] %s447
      %453 = dma.vmem_to_hbm [thread:$0]  %s448, 256, %s9, [#allocation4], 128, 128, 8
    $region77: #{tpu_custom_call.1} parent=1 // pred_fallthru
      _
    // Predicated region
    $region78: #{tpu_custom_call.1} parent=1 // pred_check
      _
    $region79: #{tpu_custom_call.1} parent=1 // pred_check_branch
      %455 = sbr.rel (0) target = $region81
    $region80: #{tpu_custom_call.1} parent=1 // pred_region
      %s457 = ssub.s32 256, 256
      %458 = vsyncadd [#allocation19], %s457
      %s459 = sshll.u32 [#allocation18], 4
      %s460 = int_to_ptr.vmem [resolvable:$true] %s459
      %465 = dma.vmem_to_hbm [thread:$0]  %s460, 256, %s10, [#allocation19], 128, 128, 8
    $region81: #{tpu_custom_call.1} parent=1 // pred_fallthru
      _
    // Predicated region
    $region82: #{tpu_custom_call.1} parent=1 // pred_check
      _
    $region83: #{tpu_custom_call.1} parent=1 // pred_check_branch
      %467 = sbr.rel (0) target = $region85
    $region84: #{tpu_custom_call.1} parent=1 // pred_region
      %s469 = ssub.s32 256, 256
      %470 = vsyncadd [#allocation19], %s469
      %s471 = sshll.u32 [#allocation20], 4
      %s472 = int_to_ptr.vmem [resolvable:$true] %s471
      %477 = dma.vmem_to_hbm [thread:$0]  %s472, 256, %s11, [#allocation19], 128, 128, 8
    $region85: #{tpu_custom_call.1} parent=1 // pred_fallthru
      _
    // Predicated region
    $region86: #{tpu_custom_call.1} parent=1 // pred_check
      _
    $region87: #{tpu_custom_call.1} parent=1 // pred_check_branch
      %479 = sbr.rel (0) target = $region89
    $region88: #{tpu_custom_call.1} parent=1 // pred_region
      %480 = dma.done [#allocation4], 256
    $region89: #{tpu_custom_call.1} parent=1 // pred_fallthru
      _
    // Predicated region
    $region90: #{tpu_custom_call.1} parent=1 // pred_check
      _
    $region91: #{tpu_custom_call.1} parent=1 // pred_check_branch
      %482 = sbr.rel (0) target = $region93
    $region92: #{tpu_custom_call.1} parent=1 // pred_region
      %483 = dma.done [#allocation19], 256
    $region93: #{tpu_custom_call.1} parent=1 // pred_fallthru
      _
    // Predicated region
    $region94: #{tpu_custom_call.1} parent=1 // pred_check
      _
    $region95: #{tpu_custom_call.1} parent=1 // pred_check_branch
      %485 = sbr.rel (0) target = $region97
    $region96: #{tpu_custom_call.1} parent=1 // pred_region
      %486 = dma.done [#allocation19], 256
    $region97: #{tpu_custom_call.1} parent=1 // pred_fallthru
      _
    %487 = vsyncpa [#allocation3], 1
    %488 = vsyncpa [#allocation6], 1
    %489 = vsyncpa [#allocation9], 1
    %490 = vsyncpa [#allocation12], 1
    %491 = vsyncpa [#allocation15], 1
    %492 = vsyncpa [#allocation4], 1
    %493 = vsyncpa [#allocation19], 1

</llo_original>
